<compile_context>
chip_gen: v6e
topology: v6e:2x2x1
jax: 0.10.0
libtpu: 0.0.40
codegen_flags: <defaults>
</compile_context>

<pallas_src>
import math

import jax
import jax.numpy as jnp
from jax import lax
from jax.experimental import pallas as pl
from jax.experimental.pallas import tpu as pltpu


def _make_attn_kernel(emit_weights, approx_reciprocal, matmul_dtype):
    """Build the kernel body.

    Refs per grid step (b, qi):
      vl_ref : VMEM i32[block_b, 1]          per-batch valid lengths
      q_ref  : VMEM  [block_b, block_q, D]
      k_ref  : VMEM  [block_b, K, D]
      v_ref  : VMEM  [block_b, K, Dv]
      o_ref  : VMEM  [block_b, block_q, Dv]
      w_ref  : VMEM  [block_b, block_q, K]   (only when emit_weights)
    """

    def kernel(vl_ref, q_ref, k_ref, v_ref, o_ref, *maybe_w_ref):
        q = q_ref[...]
        k = k_ref[...]
        v = v_ref[...]
        d = q.shape[-1]
        inv_sqrt_d = jnp.float32(1.0 / math.sqrt(d))

        if matmul_dtype is not None:
            q = q.astype(matmul_dtype)
            k = k.astype(matmul_dtype)

        # Batched Q @ K^T contracting the last dims -- no explicit k.T.
        scores = lax.dot_general(
            q, k,
            dimension_numbers=(((2,), (2,)), ((0,), (0,))),
            preferred_element_type=jnp.float32,
        ) * inv_sqrt_d                                           # (Bblk, Qblk, K)

        # masked_softmax: key positions >= valid_len[b] get -1e6 before softmax.
        vl = vl_ref[...]                                         # (Bblk, 1) int32
        col = lax.broadcasted_iota(jnp.int32, scores.shape, 2)   # key index per lane
        scores = jnp.where(col < vl[:, :, None], scores,
                           jnp.float32(-1000000.0))

        # Numerically-stable softmax over the key axis (f32 math, matches torch).
        m = jnp.max(scores, axis=-1, keepdims=True)
        e = jnp.exp(scores - m)
        denom = jnp.sum(e, axis=-1, keepdims=True)
        w = e * pl.reciprocal(denom, approx=approx_reciprocal)

        p_dtype = matmul_dtype if matmul_dtype is not None else v.dtype
        out = lax.dot_general(
            w.astype(p_dtype), v.astype(p_dtype),
            dimension_numbers=(((2,), (1,)), ((0,), (0,))),
            preferred_element_type=jnp.float32,
        )                                                        # (Bblk, Qblk, Dv)
        o_ref[...] = out.astype(o_ref.dtype)

        if emit_weights:
            maybe_w_ref[0][...] = w.astype(maybe_w_ref[0].dtype)

    return kernel


def dot_product_attention(queries, keys, values, valid_lens, *,
                          block_b=None, block_q=None,
                          return_weights=True,
                          approx_reciprocal=False,
                          matmul_dtype=None,
                          weights_dtype=jnp.float32):
    """Pallas scaled dot-product attention with per-batch length masking.

    Returns `output` (B, Q, Dv), plus `attention_weights` (B, Q, K) when
    `return_weights=True`.
    """
    B, Q, D = queries.shape
    _, K, _ = keys.shape
    Dv = values.shape[-1]

    if block_b is None:
        block_b = B          # small-batch: one grid step covers the whole batch
    if block_q is None:
        block_q = Q
    assert B % block_b == 0 and Q % block_q == 0

    vl2d = valid_lens.astype(jnp.int32).reshape(B, 1)

    grid = (B // block_b, Q // block_q)

    in_specs = [
        pl.BlockSpec((block_b, 1), lambda b, qi: (b, 0)),
        pl.BlockSpec((block_b, block_q, D), lambda b, qi: (b, qi, 0)),
        pl.BlockSpec((block_b, K, D), lambda b, qi: (b, 0, 0)),
        pl.BlockSpec((block_b, K, Dv), lambda b, qi: (b, 0, 0)),
    ]
    o_spec = pl.BlockSpec((block_b, block_q, Dv), lambda b, qi: (b, qi, 0))
    o_shape = jax.ShapeDtypeStruct((B, Q, Dv), queries.dtype)

    itemsize = jnp.dtype(queries.dtype).itemsize
    bytes_accessed = itemsize * B * (Q * D + K * D + K * Dv + Q * Dv) + 4 * B
    if return_weights:
        bytes_accessed += jnp.dtype(weights_dtype).itemsize * B * Q * K
    cost = pl.CostEstimate(
        flops=2 * B * Q * K * (D + Dv),
        transcendentals=B * Q * K,
        bytes_accessed=int(bytes_accessed),
    )

    kernel = _make_attn_kernel(return_weights, approx_reciprocal, matmul_dtype)
    compiler_params = pltpu.CompilerParams(
        dimension_semantics=("parallel", "parallel"))

    if return_weights:
        w_spec = pl.BlockSpec((block_b, block_q, K), lambda b, qi: (b, qi, 0))
        w_shape = jax.ShapeDtypeStruct((B, Q, K), weights_dtype)
        out, weights = pl.pallas_call(
            kernel,
            grid_spec=pltpu.PrefetchScalarGridSpec(
                num_scalar_prefetch=0,
                grid=grid,
                in_specs=in_specs,
                out_specs=[o_spec, w_spec],
            ),
            out_shape=(o_shape, w_shape),
            compiler_params=compiler_params,
            cost_estimate=cost,
        )(vl2d, queries, keys, values)
        return out, weights

    out = pl.pallas_call(
        kernel,
        grid_spec=pltpu.PrefetchScalarGridSpec(
            num_scalar_prefetch=0,
            grid=grid,
            in_specs=in_specs,
            out_specs=o_spec,
        ),
        out_shape=o_shape,
        compiler_params=compiler_params,
        cost_estimate=cost,
    )(vl2d, queries, keys, values)
    return out


def _reference(queries, keys, values, valid_lens):
    """Pure-JAX reference mirroring the PyTorch forward."""
    d = queries.shape[-1]
    scores = jnp.einsum("bqd,bkd->bqk", queries, keys) / math.sqrt(d)
    K = scores.shape[-1]
    col = jnp.arange(K)[None, None, :]
    mask = col < valid_lens[:, None, None]
    scores = jnp.where(mask, scores, -1000000.0)
    w = jax.nn.softmax(scores, axis=-1)
    return jnp.einsum("bqk,bkv->bqv", w, values), w


if __name__ == "__main__":
    # Small shapes consistent with the module's forward (bmm semantics).
    B, Q, K, D, Dv = 2, 8, 8, 32, 32

    key = jax.random.PRNGKey(0)
    kq, kk, kv = jax.random.split(key, 3)
    queries = jax.random.normal(kq, (B, Q, D), dtype=jnp.float32)
    keys = jax.random.normal(kk, (B, K, D), dtype=jnp.float32)
    values = jax.random.normal(kv, (B, K, Dv), dtype=jnp.float32)
    valid_lens = jnp.array([3, 6], dtype=jnp.int32)

    ref_out, ref_w = _reference(queries, keys, values, valid_lens)

    # Path 1: output + attention weights (matches the module's forward plus
    # its self.attention_weights side attribute).
    out, weights = dot_product_attention(queries, keys, values, valid_lens,
                                         return_weights=True)
    jax.block_until_ready(out)
    jax.block_until_ready(weights)
    assert jnp.allclose(out, ref_out, atol=1e-5, rtol=1e-5)
    assert jnp.allclose(weights, ref_w, atol=1e-5, rtol=1e-5)

    # Path 2: fast path without the (B, Q, K) weights store.
    out_fast = dot_product_attention(queries, keys, values, valid_lens,
                                     return_weights=False)
    jax.block_until_ready(out_fast)
    assert jnp.allclose(out_fast, ref_out, atol=1e-5, rtol=1e-5)

    print("KERNEL_OK")
</pallas_src>

<mosaic_0001>
module attributes {stable_mosaic.version = 11 : i64} {
  func.func @kernel(%arg0: i32, %arg1: i32, %arg2: memref<2x1xi32, #tpu.memory_space<vmem>>, %arg3: memref<2x8x32xf32, #tpu.memory_space<vmem>>, %arg4: memref<2x8x32xf32, #tpu.memory_space<vmem>>, %arg5: memref<2x8x32xf32, #tpu.memory_space<vmem>>, %arg6: memref<2x8x32xf32, #tpu.memory_space<vmem>>, %arg7: memref<2x8x8xf32, #tpu.memory_space<vmem>>) attributes {dimension_semantics = [#tpu.dimension_semantics<parallel>, #tpu.dimension_semantics<parallel>], iteration_bounds = array<i64: 1, 1>, scalar_prefetch = 0 : i64, scratch_operands = 0 : i64, tpu.core_type = #tpu.core_type<tc>, window_params = [{transform_indices = @transform_0, window_bounds = array<i64: 2, 1>}, {transform_indices = @transform_1, window_bounds = array<i64: 2, 8, 32>}, {transform_indices = @transform_2, window_bounds = array<i64: 2, 8, 32>}, {transform_indices = @transform_3, window_bounds = array<i64: 2, 8, 32>}, {transform_indices = @transform_4, window_bounds = array<i64: 2, 8, 32>}, {transform_indices = @transform_5, window_bounds = array<i64: 2, 8, 8>}]} {
    %c0 = arith.constant 0 : index
    %c0_0 = arith.constant 0 : index
    %c0_1 = arith.constant 0 : index
    %0 = vector.load %arg3[%c0, %c0_0, %c0_1] : memref<2x8x32xf32, #tpu.memory_space<vmem>>, vector<2x8x32xf32>
    %c0_2 = arith.constant 0 : index
    %c0_3 = arith.constant 0 : index
    %c0_4 = arith.constant 0 : index
    %1 = vector.load %arg4[%c0_2, %c0_3, %c0_4] : memref<2x8x32xf32, #tpu.memory_space<vmem>>, vector<2x8x32xf32>
    %c0_5 = arith.constant 0 : index
    %c0_6 = arith.constant 0 : index
    %c0_7 = arith.constant 0 : index
    %2 = vector.load %arg5[%c0_5, %c0_6, %c0_7] : memref<2x8x32xf32, #tpu.memory_space<vmem>>, vector<2x8x32xf32>
    %cst = arith.constant dense<0.000000e+00> : vector<2x8x8xf32>
    %3 = tpu.matmul %0, %1, %cst {dimension_numbers = #tpu.dot_dimension_numbers<[2], [2], [1], [1], [0, 0, 0, 1, 1, 1], [0], [0]>} : vector<2x8x32xf32>, vector<2x8x32xf32>, vector<2x8x8xf32> -> vector<2x8x8xf32>
    %cst_8 = arith.constant 0.176776692 : f32
    %4 = vector.broadcast %cst_8 : f32 to vector<2x8x8xf32>
    %5 = arith.mulf %3, %4 : vector<2x8x8xf32>
    %c0_9 = arith.constant 0 : index
    %c0_10 = arith.constant 0 : index
    %6 = vector.load %arg2[%c0_9, %c0_10] : memref<2x1xi32, #tpu.memory_space<vmem>>, vector<2x1xi32>
    %7 = tpu.iota {dimensions = array<i32: 2>} : vector<2x8x8xi32>
    %8 = vector.shape_cast %6 : vector<2x1xi32> to vector<2x1x1xi32>
    %9 = vector.broadcast %8 : vector<2x1x1xi32> to vector<2x8x8xi32>
    %10 = arith.cmpi slt, %7, %9 : vector<2x8x8xi32>
    %cst_11 = arith.constant -1.000000e+06 : f32
    %11 = vector.broadcast %cst_11 : f32 to vector<2x8x8xf32>
    %12 = arith.select %10, %5, %11 : vector<2x8x8xi1>, vector<2x8x8xf32>
    %cst_12 = arith.constant dense<0xFF800000> : vector<2x8xf32>
    %13 = vector.multi_reduction <maximumf>, %12, %cst_12 [2] : vector<2x8x8xf32> to vector<2x8xf32>
    %14 = vector.shape_cast %13 : vector<2x8xf32> to vector<2x8x1xf32>
    %15 = vector.broadcast %14 : vector<2x8x1xf32> to vector<2x8x8xf32>
    %16 = arith.subf %12, %15 : vector<2x8x8xf32>
    %17 = math.exp %16 : vector<2x8x8xf32>
    %cst_13 = arith.constant dense<0.000000e+00> : vector<2x8xf32>
    %18 = vector.multi_reduction <add>, %17, %cst_13 [2] : vector<2x8x8xf32> to vector<2x8xf32>
    %19 = vector.shape_cast %18 : vector<2x8xf32> to vector<2x8x1xf32>
    %20 = tpu.reciprocal %19 : vector<2x8x1xf32> -> vector<2x8x1xf32>
    %21 = vector.broadcast %20 : vector<2x8x1xf32> to vector<2x8x8xf32>
    %22 = arith.mulf %17, %21 : vector<2x8x8xf32>
    %cst_14 = arith.constant dense<0.000000e+00> : vector<2x8x32xf32>
    %23 = tpu.matmul %22, %2, %cst_14 {dimension_numbers = #tpu.dot_dimension_numbers<[2], [1], [1], [2], [0, 0, 0, 1, 1, 2], [0], [0]>} : vector<2x8x8xf32>, vector<2x8x32xf32>, vector<2x8x32xf32> -> vector<2x8x32xf32>
    %c0_15 = arith.constant 0 : index
    %c0_16 = arith.constant 0 : index
    %c0_17 = arith.constant 0 : index
    %24 = vector.load %arg6[%c0_15, %c0_16, %c0_17] : memref<2x8x32xf32, #tpu.memory_space<vmem>>, vector<2x8x32xf32>
    tpu.vector_store %arg6[%c0_15, %c0_16, %c0_17], %23 {strides = array<i32>} : memref<2x8x32xf32, #tpu.memory_space<vmem>>, vector<2x8x32xf32>,
    %c0_18 = arith.constant 0 : index
    %c0_19 = arith.constant 0 : index
    %c0_20 = arith.constant 0 : index
    %25 = vector.load %arg7[%c0_18, %c0_19, %c0_20] : memref<2x8x8xf32, #tpu.memory_space<vmem>>, vector<2x8x8xf32>
    tpu.vector_store %arg7[%c0_18, %c0_19, %c0_20], %22 {strides = array<i32>} : memref<2x8x8xf32, #tpu.memory_space<vmem>>, vector<2x8x8xf32>,
    return
  }
  func.func @transform_0(%arg0: i32, %arg1: i32) -> (i32, i32) {
    %c0_i32 = arith.constant 0 : i32
    %c0_i32_0 = arith.constant 0 : i32
    return %arg0, %c0_i32 : i32, i32
  }
  func.func @transform_1(%arg0: i32, %arg1: i32) -> (i32, i32, i32) {
    %c0_i32 = arith.constant 0 : i32
    %c0_i32_0 = arith.constant 0 : i32
    return %arg0, %arg1, %c0_i32 : i32, i32, i32
  }
  func.func @transform_2(%arg0: i32, %arg1: i32) -> (i32, i32, i32) {
    %c0_i32 = arith.constant 0 : i32
    %c0_i32_0 = arith.constant 0 : i32
    %c0_i32_1 = arith.constant 0 : i32
    return %arg0, %c0_i32, %c0_i32_0 : i32, i32, i32
  }
  func.func @transform_3(%arg0: i32, %arg1: i32) -> (i32, i32, i32) {
    %c0_i32 = arith.constant 0 : i32
    %c0_i32_0 = arith.constant 0 : i32
    %c0_i32_1 = arith.constant 0 : i32
    return %arg0, %c0_i32, %c0_i32_0 : i32, i32, i32
  }
  func.func @transform_4(%arg0: i32, %arg1: i32) -> (i32, i32, i32) {
    %c0_i32 = arith.constant 0 : i32
    %c0_i32_0 = arith.constant 0 : i32
    return %arg0, %arg1, %c0_i32 : i32, i32, i32
  }
  func.func @transform_5(%arg0: i32, %arg1: i32) -> (i32, i32, i32) {
    %c0_i32 = arith.constant 0 : i32
    %c0_i32_0 = arith.constant 0 : i32
    return %arg0, %arg1, %c0_i32 : i32, i32, i32
  }
}

</mosaic_0001>

<llo_original>
// kernel: tpu_custom_call.1
$region0: #{tpu_custom_call.1}
  #allocation0 [shape = 'u32[]', space=smem, size = 0x4, offset = 0x4, fixed_abs, tag = 'smem constant byte address 0x4 - core index']
  #allocation1 [shape = 'u32[144,128]{1,0:T(1,128)}', space=vmem, size = 0x12000, scoped, tag = 'internal scratch']
  %s0 = inlined_call_operand.vmem [shape: s32[2,1], index: 0, kind: input, shape index: {}]
  %s1 = inlined_call_operand.hbm [shape: f32[2,8,32], index: 1, kind: input, shape index: {}]
  %s2 = inlined_call_operand.hbm [shape: f32[2,8,32], index: 2, kind: input, shape index: {}]
  %s3 = inlined_call_operand.hbm [shape: f32[2,8,32], index: 3, kind: input, shape index: {}]
  %s4 = inlined_call_operand.hbm [shape: f32[2,8,32], index: 4, kind: output, shape index: {0}]
  %s5 = inlined_call_operand.hbm [shape: f32[2,8,8], index: 5, kind: output, shape index: {1}]
  %6 = xla_tuple %s4, %s5
  %s7 = sld [smem:[#allocation0]]
  $region46: #{tpu_custom_call.1} parent=0
    _
  %s9 = ssub.s32 1, %s7
  %s10 = scalar_select 0, %s9, %s7
  $region1: #{tpu_custom_call.1} parent=0
    #allocation2 [shape = 'u8[8192]{0}', space=vmem, size = 0x2000, scoped, tag = 'input window, operand 1, single buffered']
    #allocation3 [shape = 's32[1]{0}', space=sflag, size = 0x4, scoped, tag = 'scoped memory for tpu_custom_call.1']
    #allocation4 [shape = 's32[1]{0}', space=sflag, size = 0x4, scoped, tag = 'scoped memory for tpu_custom_call.1']
    #allocation5 [shape = 'u8[8192]{0}', space=vmem, size = 0x2000, scoped, tag = 'input window, operand 2, single buffered']
    #allocation6 [shape = 's32[1]{0}', space=sflag, size = 0x4, scoped, tag = 'scoped memory for tpu_custom_call.1']
    #allocation7 [shape = 'u8[8192]{0}', space=vmem, size = 0x2000, scoped, tag = 'input window, operand 3, single buffered']
    #allocation8 [shape = 'u8[8192]{0}', space=vmem, size = 0x2000, scoped, tag = 'output window, operand 0, single buffered']
    #allocation9 [shape = 'u8[8192]{0}', space=vmem, size = 0x2000, scoped, tag = 'output window, operand 1, single buffered']
    #allocation10 [shape = 's32[1]{0}', space=sflag, size = 0x4, scoped, tag = 'scoped memory for tpu_custom_call.1']
    %11 = vsyncpa [#allocation3], 0
    %12 = vsyncpa [#allocation6], 0
    %13 = vsyncpa [#allocation4], 0
    %14 = vsyncpa [#allocation10], 0
    // Predicated region
    $region2: #{tpu_custom_call.1} parent=1 // pred_check
      _
    $region3: #{tpu_custom_call.1} parent=1 // pred_check_branch
      %16 = sbr.rel (0) target = $region5
    $region4: #{tpu_custom_call.1} parent=1 // pred_region
      _
    $region5: #{tpu_custom_call.1} parent=1 // pred_fallthru
      _
    // Predicated region
    $region6: #{tpu_custom_call.1} parent=1 // pred_check
      _
    $region7: #{tpu_custom_call.1} parent=1 // pred_check_branch
      %18 = sbr.rel (0) target = $region9
    $region8: #{tpu_custom_call.1} parent=1 // pred_region
      %s20 = ssub.s32 256, 256
      %21 = vsyncadd [#allocation3], %s20
      %s22 = sshll.u32 [#allocation2], 4
      %s23 = int_to_ptr.vmem [resolvable:$true] %s22
      %28 = dma.hbm_to_vmem [thread:$0]  %s1, 256, %s23, [#allocation3], 128, 128, 8
    $region9: #{tpu_custom_call.1} parent=1 // pred_fallthru
      _
    // Predicated region
    $region10: #{tpu_custom_call.1} parent=1 // pred_check
      _
    $region11: #{tpu_custom_call.1} parent=1 // pred_check_branch
      %30 = sbr.rel (0) target = $region13
    $region12: #{tpu_custom_call.1} parent=1 // pred_region
      %s32 = ssub.s32 256, 256
      %33 = vsyncadd [#allocation6], %s32
      %s34 = sshll.u32 [#allocation5], 4
      %s35 = int_to_ptr.vmem [resolvable:$true] %s34
      %40 = dma.hbm_to_vmem [thread:$0]  %s2, 256, %s35, [#allocation6], 128, 128, 8
    $region13: #{tpu_custom_call.1} parent=1 // pred_fallthru
      _
    // Predicated region
    $region14: #{tpu_custom_call.1} parent=1 // pred_check
      _
    $region15: #{tpu_custom_call.1} parent=1 // pred_check_branch
      %42 = sbr.rel (0) target = $region17
    $region16: #{tpu_custom_call.1} parent=1 // pred_region
      %s44 = ssub.s32 256, 256
      %45 = vsyncadd [#allocation6], %s44
      %s46 = sshll.u32 [#allocation7], 4
      %s47 = int_to_ptr.vmem [resolvable:$true] %s46
      %52 = dma.hbm_to_vmem [thread:$0]  %s3, 256, %s47, [#allocation6], 128, 128, 8
    $region17: #{tpu_custom_call.1} parent=1 // pred_fallthru
      _
    // Predicated region
    $region18: #{tpu_custom_call.1} parent=1 // pred_check
      _
    $region19: #{tpu_custom_call.1} parent=1 // pred_check_branch
      %54 = sbr.rel (0) target = $region21
    $region20: #{tpu_custom_call.1} parent=1 // pred_region
      %55 = dma.done [#allocation3], 256
    $region21: #{tpu_custom_call.1} parent=1 // pred_fallthru
      _
    // Predicated region
    $region22: #{tpu_custom_call.1} parent=1 // pred_check
      _
    $region23: #{tpu_custom_call.1} parent=1 // pred_check_branch
      %57 = sbr.rel (0) target = $region25
    $region24: #{tpu_custom_call.1} parent=1 // pred_region
      %58 = dma.done [#allocation6], 256
    $region25: #{tpu_custom_call.1} parent=1 // pred_fallthru
      _
    // Predicated region
    $region26: #{tpu_custom_call.1} parent=1 // pred_check
      _
    $region27: #{tpu_custom_call.1} parent=1 // pred_check_branch
      %60 = sbr.rel (0) target = $region29
    $region28: #{tpu_custom_call.1} parent=1 // pred_region
      %61 = dma.done [#allocation6], 256
    $region29: #{tpu_custom_call.1} parent=1 // pred_fallthru
      _
    %v62 = vld [vmem:[#allocation2] sm:$0xff]
    %v63 = vld [vmem:[#allocation2 + $0x8] sm:$0xff]
    %v64 = vld [vmem:[#allocation5] sm:$0xff]
    %v65 = vld [vmem:[#allocation5 + $0x8] sm:$0xff]
    %v66 = vld [vmem:[#allocation7] sm:$0xff]
    %v67 = vld [vmem:[#allocation7 + $0x8] sm:$0xff]
    %vm68 = vcmask 261120
    %v70 = vsel %vm68, %v62, 0
    %v73 = vsel %vm68, %v64, 0
    %75 = vmatprep.subr.mxu0 0.0
    %76 = vmatpush1.xpose.msra.mxu0 0.0
    %77 = vmatprep.subr.mxu0 0.0
    %78 = vmatpush1.xpose.msra.mxu0 0.0
    %79 = vmatprep.subr.mxu0 0.0
    %80 = vmatpush1.xpose.msra.mxu0 0.0
    %81 = vmatprep.subr.mxu0 0.0
    %82 = vmatpush1.xpose.msra.mxu0 0.0
    %83 = vmatprep.subr.mxu0 0.0
    %84 = vmatpush1.xpose.msra.mxu0 0.0
    %85 = vmatprep.subr.mxu0 0.0
    %86 = vmatpush1.xpose.msra.mxu0 0.0
    %87 = vmatprep.subr.mxu0 0.0
    %88 = vmatpush1.xpose.msra.mxu0 0.0
    %89 = vmatprep.subr.mxu0 0.0
    %90 = vmatpush1.xpose.msra.mxu0 0.0
    %91 = vmatprep.subr.mxu0 0.0
    %92 = vmatpush1.xpose.msra.mxu0 0.0
    %93 = vmatprep.subr.mxu0 0.0
    %94 = vmatpush1.xpose.msra.mxu0 0.0
    %95 = vmatprep.subr.mxu0 0.0
    %96 = vmatpush1.xpose.msra.mxu0 0.0
    %97 = vmatprep.subr.mxu0 0.0
    %98 = vmatpush1.xpose.msra.mxu0 0.0
    %99 = vmatprep.subr.mxu0 0.0
    %100 = vmatpush1.xpose.msra.mxu0 0.0
    %101 = vmatprep.subr.mxu0 0.0
    %102 = vmatpush1.xpose.msra.mxu0 0.0
    %103 = vmatprep.subr.mxu0 0.0
    %104 = vmatpush1.xpose.msra.mxu0 0.0
    %105 = vmatprep.subr.mxu0 0.0
    %106 = vmatpush1.xpose.msra.mxu0 %v73
    %107 = vmatprep.subr.mxu0 0.0
    %108 = vmatpush2.xpose.msra.mxu0 0.0
    %109 = vmatprep.subr.mxu0 0.0
    %110 = vmatpush2.xpose.msra.mxu0 0.0
    %111 = vmatprep.subr.mxu0 0.0
    %112 = vmatpush2.xpose.msra.mxu0 0.0
    %113 = vmatprep.subr.mxu0 0.0
    %114 = vmatpush2.xpose.msra.mxu0 0.0
    %115 = vmatprep.subr.mxu0 0.0
    %116 = vmatpush2.xpose.msra.mxu0 0.0
    %117 = vmatprep.subr.mxu0 0.0
    %118 = vmatpush2.xpose.msra.mxu0 0.0
    %119 = vmatprep.subr.mxu0 0.0
    %120 = vmatpush2.xpose.msra.mxu0 0.0
    %121 = vmatprep.subr.mxu0 0.0
    %122 = vmatpush2.xpose.msra.mxu0 0.0
    %123 = vmatprep.subr.mxu0 0.0
    %124 = vmatpush2.xpose.msra.mxu0 0.0
    %125 = vmatprep.subr.mxu0 0.0
    %126 = vmatpush2.xpose.msra.mxu0 0.0
    %127 = vmatprep.subr.mxu0 0.0
    %128 = vmatpush2.xpose.msra.mxu0 0.0
    %129 = vmatprep.subr.mxu0 0.0
    %130 = vmatpush2.xpose.msra.mxu0 0.0
    %131 = vmatprep.subr.mxu0 0.0
    %132 = vmatpush2.xpose.msra.mxu0 0.0
    %133 = vmatprep.subr.mxu0 0.0
    %134 = vmatpush2.xpose.msra.mxu0 0.0
    %135 = vmatprep.subr.mxu0 0.0
    %136 = vmatpush2.xpose.msra.mxu0 0.0
    %137 = vmatprep.subr.mxu0 0.0
    %138 = vmatpush2.xpose.msra.mxu0 0.0
    %139 = vmatprep.mubr.f32.mxu0 0.0
    %140 = vmatmul.mubr.f32.gmra.mxu0 %v70
    %v141 = vpop.f32.mrf.mxu0
    %v142 = vadd.f32 0.0, %v141
    %v143 = vpop.f32.mrf.mxu0
    %144 = vdwg.mxu0
    %v146 = vsel %vm68, %v63, 0
    %v149 = vsel %vm68, %v65, 0
    %151 = vmatprep.subr.mxu0 0.0
    %152 = vmatpush1.xpose.msra.mxu0 0.0
    %153 = vmatprep.subr.mxu0 0.0
    %154 = vmatpush1.xpose.msra.mxu0 0.0
    %155 = vmatprep.subr.mxu0 0.0
    %156 = vmatpush1.xpose.msra.mxu0 0.0
    %157 = vmatprep.subr.mxu0 0.0
    %158 = vmatpush1.xpose.msra.mxu0 0.0
    %159 = vmatprep.subr.mxu0 0.0
    %160 = vmatpush1.xpose.msra.mxu0 0.0
    %161 = vmatprep.subr.mxu0 0.0
    %162 = vmatpush1.xpose.msra.mxu0 0.0
    %163 = vmatprep.subr.mxu0 0.0
    %164 = vmatpush1.xpose.msra.mxu0 0.0
    %165 = vmatprep.subr.mxu0 0.0
    %166 = vmatpush1.xpose.msra.mxu0 0.0
    %167 = vmatprep.subr.mxu0 0.0
    %168 = vmatpush1.xpose.msra.mxu0 0.0
    %169 = vmatprep.subr.mxu0 0.0
    %170 = vmatpush1.xpose.msra.mxu0 0.0
    %171 = vmatprep.subr.mxu0 0.0
    %172 = vmatpush1.xpose.msra.mxu0 0.0
    %173 = vmatprep.subr.mxu0 0.0
    %174 = vmatpush1.xpose.msra.mxu0 0.0
    %175 = vmatprep.subr.mxu0 0.0
    %176 = vmatpush1.xpose.msra.mxu0 0.0
    %177 = vmatprep.subr.mxu0 0.0
    %178 = vmatpush1.xpose.msra.mxu0 0.0
    %179 = vmatprep.subr.mxu0 0.0
    %180 = vmatpush1.xpose.msra.mxu0 0.0
    %181 = vmatprep.subr.mxu0 0.0
    %182 = vmatpush1.xpose.msra.mxu0 %v149
    %183 = vmatprep.subr.mxu0 0.0
    %184 = vmatpush2.xpose.msra.mxu0 0.0
    %185 = vmatprep.subr.mxu0 0.0
    %186 = vmatpush2.xpose.msra.mxu0 0.0
    %187 = vmatprep.subr.mxu0 0.0
    %188 = vmatpush2.xpose.msra.mxu0 0.0
    %189 = vmatprep.subr.mxu0 0.0
    %190 = vmatpush2.xpose.msra.mxu0 0.0
    %191 = vmatprep.subr.mxu0 0.0
    %192 = vmatpush2.xpose.msra.mxu0 0.0
    %193 = vmatprep.subr.mxu0 0.0
    %194 = vmatpush2.xpose.msra.mxu0 0.0
    %195 = vmatprep.subr.mxu0 0.0
    %196 = vmatpush2.xpose.msra.mxu0 0.0
    %197 = vmatprep.subr.mxu0 0.0
    %198 = vmatpush2.xpose.msra.mxu0 0.0
    %199 = vmatprep.subr.mxu0 0.0
    %200 = vmatpush2.xpose.msra.mxu0 0.0
    %201 = vmatprep.subr.mxu0 0.0
    %202 = vmatpush2.xpose.msra.mxu0 0.0
    %203 = vmatprep.subr.mxu0 0.0
    %204 = vmatpush2.xpose.msra.mxu0 0.0
    %205 = vmatprep.subr.mxu0 0.0
    %206 = vmatpush2.xpose.msra.mxu0 0.0
    %207 = vmatprep.subr.mxu0 0.0
    %208 = vmatpush2.xpose.msra.mxu0 0.0
    %209 = vmatprep.subr.mxu0 0.0
    %210 = vmatpush2.xpose.msra.mxu0 0.0
    %211 = vmatprep.subr.mxu0 0.0
    %212 = vmatpush2.xpose.msra.mxu0 0.0
    %213 = vmatprep.subr.mxu0 0.0
    %214 = vmatpush2.xpose.msra.mxu0 0.0
    %215 = vmatprep.mubr.f32.mxu0 0.0
    %216 = vmatmul.mubr.f32.gmra.mxu0 %v146
    %v217 = vpop.f32.mrf.mxu0
    %v218 = vadd.f32 0.0, %v217
    %v219 = vpop.f32.mrf.mxu0
    %220 = vdwg.mxu0
    %v221 = vmul.f32 %v142, 0.17677669
    %v222 = vmul.f32 %v218, 0.17677669
    %v223 = vld [vmem:[%s0] sm:$0x3]
    %v224 = vlaneseq
    %v225 = vand.u32 %v224, 127
    %v227 = vunpack.c.l.s4 1966171168
    %v228 = vunpack.c.0.s8 %v227
    %v229 = vlaneseq
    %v230 = vshrl.u32 %v229, 7
    %v231 = vsub.s32 %v228, %v230
    %v232 = vrot.slane %v223, %v231
    %v233 = vcombine.high %v232, %v232
    %v235 = vunpack.c.l.s4 1966171168
    %v236 = vunpack.c.0.s8 %v235
    %v237 = vlaneseq
    %v238 = vshrl.u32 %v237, 7
    %v239 = vsub.s32 %v236, %v238
    %v240 = vrot.slane %v232, %v239
    %v242 = vunpack.c.l.s4 1966171168
    %v243 = vunpack.c.0.s8 %v242
    %v244 = vlaneseq
    %v245 = vshrl.u32 %v244, 7
    %v246 = vsub.s32 %v243, %v245
    %v247 = vrot.slane %v233, %v246
    %v248 = vlaneseq
    %v249 = vshrl.u32 %v248, 7
    %v250 = vsub.s32 0, %v249
    %v251 = vrot.slane %v240, %v250
    %v252 = vlaneseq
    %v253 = vshrl.u32 %v252, 7
    %v254 = vsub.s32 0, %v253
    %v255 = vrot.slane %v247, %v254
    %256 = vset.pattern.permute.xlu0 0
    %257 = vperm.xlu0 %256, %v251
    %v258 = vpop.permute.xlu0 %257
    %259 = vset.pattern.permute.xlu0 0
    %260 = vperm.xlu0 %259, %v255
    %v261 = vpop.permute.xlu0 %260
    %vm262 = vcmp.lt.s32.totalorder %v225, %v258
    %vm263 = vcmp.lt.s32.totalorder %v225, %v261
    %v264 = vsel %vm262, %v221, -1000000.0
    %v265 = vsel %vm263, %v222, -1000000.0
    %vm266 = vcmask 64512
    %v267 = vsel %vm266, %v264, -inf
    %268 = vmax.xlane.f32.xlu0 %v267
    %v269 = vpop.xlane.xlu0 %268
    %v270 = vsel %vm266, %v265, -inf
    %271 = vmax.xlane.f32.xlu0 %v270
    %v272 = vpop.xlane.xlu0 %271
    %v273 = vsub.f32 %v264, %v269
    %v274 = vsub.f32 %v265, %v272
    %v275 = vmul.f32 %v273, 1.442695
    %v276 = vpow.pop %v275
    %v277 = vmul.f32 %v274, 1.442695
    %v278 = vpow.pop %v277
    %v279 = vsel %vm266, %v276, 0.0
    %280 = vadd.xlane.f32.xlu0 %v279
    %v281 = vpop.xlane.xlu0 %280
    %v282 = vsel %vm266, %v278, 0.0
    %283 = vadd.xlane.f32.xlu0 %v282
    %v284 = vpop.xlane.xlu0 %283
    %v285 = vrcp.pop %v281
    %v286 = vrcp.pop %v284
    %v287 = vmul.f32 %v276, %v285
    %v288 = vmul.f32 %v278, %v286
    %v290 = vsel %vm266, %v287, 0
    %292 = vmatprep.subr.mxu0 0.0
    %293 = vmatpush1.msra.mxu0 0.0
    %294 = vmatprep.subr.mxu0 0.0
    %295 = vmatpush1.msra.mxu0 0.0
    %296 = vmatprep.subr.mxu0 0.0
    %297 = vmatpush1.msra.mxu0 0.0
    %298 = vmatprep.subr.mxu0 0.0
    %299 = vmatpush1.msra.mxu0 0.0
    %300 = vmatprep.subr.mxu0 0.0
    %301 = vmatpush1.msra.mxu0 0.0
    %302 = vmatprep.subr.mxu0 0.0
    %303 = vmatpush1.msra.mxu0 0.0
    %304 = vmatprep.subr.mxu0 0.0
    %305 = vmatpush1.msra.mxu0 0.0
    %306 = vmatprep.subr.mxu0 0.0
    %307 = vmatpush1.msra.mxu0 0.0
    %308 = vmatprep.subr.mxu0 0.0
    %309 = vmatpush1.msra.mxu0 0.0
    %310 = vmatprep.subr.mxu0 0.0
    %311 = vmatpush1.msra.mxu0 0.0
    %312 = vmatprep.subr.mxu0 0.0
    %313 = vmatpush1.msra.mxu0 0.0
    %314 = vmatprep.subr.mxu0 0.0
    %315 = vmatpush1.msra.mxu0 0.0
    %316 = vmatprep.subr.mxu0 0.0
    %317 = vmatpush1.msra.mxu0 0.0
    %318 = vmatprep.subr.mxu0 0.0
    %319 = vmatpush1.msra.mxu0 0.0
    %320 = vmatprep.subr.mxu0 0.0
    %321 = vmatpush1.msra.mxu0 0.0
    %322 = vmatprep.subr.mxu0 0.0
    %323 = vmatpush1.msra.mxu0 %v66
    %324 = vmatprep.subr.mxu0 0.0
    %325 = vmatpush2.msra.mxu0 0.0
    %326 = vmatprep.subr.mxu0 0.0
    %327 = vmatpush2.msra.mxu0 0.0
    %328 = vmatprep.subr.mxu0 0.0
    %329 = vmatpush2.msra.mxu0 0.0
    %330 = vmatprep.subr.mxu0 0.0
    %331 = vmatpush2.msra.mxu0 0.0
    %332 = vmatprep.subr.mxu0 0.0
    %333 = vmatpush2.msra.mxu0 0.0
    %334 = vmatprep.subr.mxu0 0.0
    %335 = vmatpush2.msra.mxu0 0.0
    %336 = vmatprep.subr.mxu0 0.0
    %337 = vmatpush2.msra.mxu0 0.0
    %338 = vmatprep.subr.mxu0 0.0
    %339 = vmatpush2.msra.mxu0 0.0
    %340 = vmatprep.subr.mxu0 0.0
    %341 = vmatpush2.msra.mxu0 0.0
    %342 = vmatprep.subr.mxu0 0.0
    %343 = vmatpush2.msra.mxu0 0.0
    %344 = vmatprep.subr.mxu0 0.0
    %345 = vmatpush2.msra.mxu0 0.0
    %346 = vmatprep.subr.mxu0 0.0
    %347 = vmatpush2.msra.mxu0 0.0
    %348 = vmatprep.subr.mxu0 0.0
    %349 = vmatpush2.msra.mxu0 0.0
    %350 = vmatprep.subr.mxu0 0.0
    %351 = vmatpush2.msra.mxu0 0.0
    %352 = vmatprep.subr.mxu0 0.0
    %353 = vmatpush2.msra.mxu0 0.0
    %354 = vmatprep.subr.mxu0 0.0
    %355 = vmatpush2.msra.mxu0 0.0
    %356 = vmatprep.mubr.f32.mxu0 0.0
    %357 = vmatmul.mubr.f32.gmra.mxu0 %v290
    %v358 = vpop.f32.mrf.mxu0
    %v359 = vadd.f32 0.0, %v358
    %v360 = vpop.f32.mrf.mxu0
    %361 = vdwg.mxu0
    %v363 = vsel %vm266, %v288, 0
    %365 = vmatprep.subr.mxu0 0.0
    %366 = vmatpush1.msra.mxu0 0.0
    %367 = vmatprep.subr.mxu0 0.0
    %368 = vmatpush1.msra.mxu0 0.0
    %369 = vmatprep.subr.mxu0 0.0
    %370 = vmatpush1.msra.mxu0 0.0
    %371 = vmatprep.subr.mxu0 0.0
    %372 = vmatpush1.msra.mxu0 0.0
    %373 = vmatprep.subr.mxu0 0.0
    %374 = vmatpush1.msra.mxu0 0.0
    %375 = vmatprep.subr.mxu0 0.0
    %376 = vmatpush1.msra.mxu0 0.0
    %377 = vmatprep.subr.mxu0 0.0
    %378 = vmatpush1.msra.mxu0 0.0
    %379 = vmatprep.subr.mxu0 0.0
    %380 = vmatpush1.msra.mxu0 0.0
    %381 = vmatprep.subr.mxu0 0.0
    %382 = vmatpush1.msra.mxu0 0.0
    %383 = vmatprep.subr.mxu0 0.0
    %384 = vmatpush1.msra.mxu0 0.0
    %385 = vmatprep.subr.mxu0 0.0
    %386 = vmatpush1.msra.mxu0 0.0
    %387 = vmatprep.subr.mxu0 0.0
    %388 = vmatpush1.msra.mxu0 0.0
    %389 = vmatprep.subr.mxu0 0.0
    %390 = vmatpush1.msra.mxu0 0.0
    %391 = vmatprep.subr.mxu0 0.0
    %392 = vmatpush1.msra.mxu0 0.0
    %393 = vmatprep.subr.mxu0 0.0
    %394 = vmatpush1.msra.mxu0 0.0
    %395 = vmatprep.subr.mxu0 0.0
    %396 = vmatpush1.msra.mxu0 %v67
    %397 = vmatprep.subr.mxu0 0.0
    %398 = vmatpush2.msra.mxu0 0.0
    %399 = vmatprep.subr.mxu0 0.0
    %400 = vmatpush2.msra.mxu0 0.0
    %401 = vmatprep.subr.mxu0 0.0
    %402 = vmatpush2.msra.mxu0 0.0
    %403 = vmatprep.subr.mxu0 0.0
    %404 = vmatpush2.msra.mxu0 0.0
    %405 = vmatprep.subr.mxu0 0.0
    %406 = vmatpush2.msra.mxu0 0.0
    %407 = vmatprep.subr.mxu0 0.0
    %408 = vmatpush2.msra.mxu0 0.0
    %409 = vmatprep.subr.mxu0 0.0
    %410 = vmatpush2.msra.mxu0 0.0
    %411 = vmatprep.subr.mxu0 0.0
    %412 = vmatpush2.msra.mxu0 0.0
    %413 = vmatprep.subr.mxu0 0.0
    %414 = vmatpush2.msra.mxu0 0.0
    %415 = vmatprep.subr.mxu0 0.0
    %416 = vmatpush2.msra.mxu0 0.0
    %417 = vmatprep.subr.mxu0 0.0
    %418 = vmatpush2.msra.mxu0 0.0
    %419 = vmatprep.subr.mxu0 0.0
    %420 = vmatpush2.msra.mxu0 0.0
    %421 = vmatprep.subr.mxu0 0.0
    %422 = vmatpush2.msra.mxu0 0.0
    %423 = vmatprep.subr.mxu0 0.0
    %424 = vmatpush2.msra.mxu0 0.0
    %425 = vmatprep.subr.mxu0 0.0
    %426 = vmatpush2.msra.mxu0 0.0
    %427 = vmatprep.subr.mxu0 0.0
    %428 = vmatpush2.msra.mxu0 0.0
    %429 = vmatprep.mubr.f32.mxu0 0.0
    %430 = vmatmul.mubr.f32.gmra.mxu0 %v363
    %v431 = vpop.f32.mrf.mxu0
    %v432 = vadd.f32 0.0, %v431
    %v433 = vpop.f32.mrf.mxu0
    %434 = vdwg.mxu0
    %435 = vst.msk [vmem:[#allocation8] sm:$0xff] %vm68, %v359
    %436 = vst.msk [vmem:[#allocation8 + $0x8] sm:$0xff] %vm68, %v432
    %437 = vst.msk [vmem:[#allocation9] sm:$0xff] %vm266, %v287
    %438 = vst.msk [vmem:[#allocation9 + $0x8] sm:$0xff] %vm266, %v288
    // Predicated region
    $region30: #{tpu_custom_call.1} parent=1 // pred_check
      _
    $region31: #{tpu_custom_call.1} parent=1 // pred_check_branch
      %440 = sbr.rel (0) target = $region33
    $region32: #{tpu_custom_call.1} parent=1 // pred_region
      %s442 = ssub.s32 256, 256
      %443 = vsyncadd [#allocation4], %s442
      %s444 = sshll.u32 [#allocation8], 4
      %s445 = int_to_ptr.vmem [resolvable:$true] %s444
      %450 = dma.vmem_to_hbm [thread:$0]  %s445, 256, %s4, [#allocation4], 128, 128, 8
    $region33: #{tpu_custom_call.1} parent=1 // pred_fallthru
      _
    // Predicated region
    $region34: #{tpu_custom_call.1} parent=1 // pred_check
      _
    $region35: #{tpu_custom_call.1} parent=1 // pred_check_branch
      %452 = sbr.rel (0) target = $region37
    $region36: #{tpu_custom_call.1} parent=1 // pred_region
      %s454 = ssub.s32 256, 256
      %455 = vsyncadd [#allocation10], %s454
      %s456 = sshll.u32 [#allocation9], 4
      %s457 = int_to_ptr.vmem [resolvable:$true] %s456
      %462 = dma.vmem_to_hbm [thread:$0]  %s457, 256, %s5, [#allocation10], 128, 128, 8
    $region37: #{tpu_custom_call.1} parent=1 // pred_fallthru
      _
    // Predicated region
    $region38: #{tpu_custom_call.1} parent=1 // pred_check
      _
    $region39: #{tpu_custom_call.1} parent=1 // pred_check_branch
      %464 = sbr.rel (0) target = $region41
    $region40: #{tpu_custom_call.1} parent=1 // pred_region
      %465 = dma.done [#allocation4], 256
    $region41: #{tpu_custom_call.1} parent=1 // pred_fallthru
      _
    // Predicated region
    $region42: #{tpu_custom_call.1} parent=1 // pred_check
      _
    $region43: #{tpu_custom_call.1} parent=1 // pred_check_branch
      %467 = sbr.rel (0) target = $region45
    $region44: #{tpu_custom_call.1} parent=1 // pred_region
      %468 = dma.done [#allocation10], 256
    $region45: #{tpu_custom_call.1} parent=1 // pred_fallthru
      _
    %469 = vsyncpa [#allocation3], 1
    %470 = vsyncpa [#allocation6], 1
    %471 = vsyncpa [#allocation4], 1
    %472 = vsyncpa [#allocation10], 1

</llo_original>
